<compile_context>
chip_gen: v7x
topology: tpu7x:2x2x1
jax: 0.10.0
libtpu: 0.0.40
codegen_flags: <defaults>
</compile_context>

<pallas_src>
import math

import jax
import jax.numpy as jnp
from jax.experimental import pallas as pl
from jax.experimental.pallas import tpu as pltpu


def _round_up(n, m):
    return (n + m - 1) // m * m


def _transform_kernel(x_ref, w_ref, b_ref, gamma_ref, beta_ref, o_ref):
    # Cast the activation tile in-kernel (no wrapper-side pre-pass over HBM).
    x = x_ref[...].astype(w_ref.dtype)

    # Dense: (tm, H) @ (H, H) on the MXU, f32 accumulation.
    h = jnp.dot(x, w_ref[...], preferred_element_type=jnp.float32)
    h = h + b_ref[...]

    # gelu (erf formulation - exact match to the PyTorch reference).
    # (On v5e, if VALU-bound, a tanh-approx gelu on the EUP is the cheaper
    #  alternative; kept erf here for bit-faithful semantics.)
    h = h * 0.5 * (1.0 + jax.lax.erf(h * (1.0 / math.sqrt(2.0))))

    # BertLayerNorm: biased variance over the last axis, eps inside the sqrt.
    # var = E[h^2] - mean^2 : the two reductions overlap in the XLU slot and we
    # skip the explicit (h-u)^2 pass. Post-gelu values are O(1) so the rounding
    # difference vs the centered form is benign.
    u = jnp.mean(h, axis=-1, keepdims=True)
    q = jnp.mean(h * h, axis=-1, keepdims=True)
    var = jnp.maximum(q - u * u, 0.0)
    r = jax.lax.rsqrt(var + 1e-12)          # rsqrt -> EUP, no vector divide
    o_ref[...] = ((h - u) * (gamma_ref[...] * r) + beta_ref[...]).astype(o_ref.dtype)


def bert_prediction_head_transform(x, w, b, gamma, beta, *, tm=512,
                                   compute_dtype=jnp.bfloat16,
                                   out_dtype=None,
                                   vmem_limit_bytes=None):
    """BertPredictionHeadTransform forward.

    x:     (B, S, H) activations (any float dtype; cast in-kernel).
    w:     (H_in, H_out) dense weight, i.e. PyTorch `dense.weight.T`.
           Pass it pre-cast to `compute_dtype` to skip the per-call convert.
    b, gamma, beta: (H,) dense bias / LayerNorm weight / LayerNorm bias.
    out_dtype: output dtype; default x.dtype. Pass jnp.bfloat16 when the
           downstream consumer accepts it (cuts write traffic ~1.3x mem-bound).
    Returns (B, S, H).
    """
    B, S, H = x.shape
    M = B * S
    out_dtype = x.dtype if out_dtype is None else out_dtype

    # Row tile: sublane(8)-aligned; if the whole problem fits in one tile, use
    # a single full-extent block. No padding / slicing: the partial last block
    # (when M % tm != 0) is handled by Pallas' masked boundary block, which is
    # safe because every output row depends only on its own input row.
    tm = max(8, _round_up(int(tm), 8))
    tm_eff = M if M <= tm else tm
    grid_m = pl.cdiv(M, tm_eff)

    x2 = x.reshape(M, H)                       # metadata-only reshape, no copy
    w_c = w if w.dtype == compute_dtype else w.astype(compute_dtype)
    b2 = b.reshape(1, H).astype(jnp.float32)
    g2 = gamma.reshape(1, H).astype(jnp.float32)
    z2 = beta.reshape(1, H).astype(jnp.float32)

    xbytes = jnp.dtype(x.dtype).itemsize
    wbytes = jnp.dtype(w_c.dtype).itemsize
    obytes = jnp.dtype(out_dtype).itemsize

    if vmem_limit_bytes is None:
        est = (2 * tm_eff * H * xbytes         # double-buffered activation tile
               + 2 * tm_eff * H * obytes       # double-buffered output tile
               + H * H * wbytes                # resident single-buffered weight
               + 6 * H * 4                     # bias / gamma / beta
               + 3 * tm_eff * H * 4)           # f32 gelu / LN intermediates
        try:
            cap = int(0.8 * pltpu.get_tpu_info().vmem_capacity_bytes)
        except Exception:
            cap = 48 << 20                     # conservative: below v7x 64 MiB
        vmem_limit_bytes = int(min(max(int(1.3 * est), 32 << 20), cap))

    cost = pl.CostEstimate(
        flops=int(2 * M * H * H + 12 * M * H),
        transcendentals=int(M * H + M),
        bytes_accessed=int(M * H * (xbytes + obytes) + H * H * wbytes + 3 * H * 4),
    )

    # Single-buffer the grid-invariant operands (weight + LN params).
    inv = {"pipeline_mode": pl.Buffered(1)} if hasattr(pl, "Buffered") else {}

    out2 = pl.pallas_call(
        _transform_kernel,
        out_shape=jax.ShapeDtypeStruct((M, H), out_dtype),
        grid_spec=pltpu.PrefetchScalarGridSpec(
            num_scalar_prefetch=0,
            grid=(grid_m,),
            in_specs=[
                pl.BlockSpec((tm_eff, H), lambda i: (i, 0)),      # activation rows
                pl.BlockSpec((H, H), lambda i: (0, 0), **inv),    # dense W (resident)
                pl.BlockSpec((1, H), lambda i: (0, 0), **inv),    # dense bias
                pl.BlockSpec((1, H), lambda i: (0, 0), **inv),    # LN gamma
                pl.BlockSpec((1, H), lambda i: (0, 0), **inv),    # LN beta
            ],
            out_specs=pl.BlockSpec((tm_eff, H), lambda i: (i, 0)),
        ),
        compiler_params=pltpu.CompilerParams(
            dimension_semantics=("parallel",),   # row-parallel; shards across TCs
            vmem_limit_bytes=vmem_limit_bytes,
        ),
        cost_estimate=cost,
    )(x2, w_c, b2, g2, z2)

    return out2.reshape(B, S, H)


def _reference(x, w, b, gamma, beta):
    h = jnp.einsum("bsh,ho->bso", x.astype(jnp.float32), w.astype(jnp.float32)) + b
    h = h * 0.5 * (1.0 + jax.lax.erf(h / math.sqrt(2.0)))
    u = jnp.mean(h, axis=-1, keepdims=True)
    s = jnp.mean((h - u) ** 2, axis=-1, keepdims=True)
    h = (h - u) / jnp.sqrt(s + 1e-12)
    return gamma * h + beta


if __name__ == "__main__":
    key = jax.random.PRNGKey(0)
    B, S, H = 2, 8, 32  # small test shapes; real BERT (H=768/1024) is lane-aligned

    k_x, k_w, k_b = jax.random.split(key, 3)
    x = jax.random.normal(k_x, (B, S, H), dtype=jnp.float32)
    # Dense weight stored pre-transposed as (H_in, H_out); LN params as in BertLayerNorm.
    w = jax.random.normal(k_w, (H, H), dtype=jnp.float32) * 0.02
    b = jax.random.normal(k_b, (H,), dtype=jnp.float32) * 0.02
    gamma = jnp.ones((H,), dtype=jnp.float32)
    beta = jnp.zeros((H,), dtype=jnp.float32)

    ref = _reference(x, w, b, gamma, beta)

    # f32 compute path: matches the PyTorch/f32 reference to f32 rounding.
    out_f32 = jax.block_until_ready(
        bert_prediction_head_transform(x, w, b, gamma, beta,
                                       compute_dtype=jnp.float32))
    assert out_f32.shape == (B, S, H)
    assert jnp.allclose(out_f32, ref, atol=2e-4, rtol=2e-4), "f32 mismatch vs reference"

    # Default path: bf16 matmul on the MXU with f32 accumulation.
    out_bf16 = jax.block_until_ready(
        bert_prediction_head_transform(x, w, b, gamma, beta))
    assert out_bf16.shape == (B, S, H)
    assert jnp.allclose(out_bf16, ref, atol=5e-2, rtol=0.0), "bf16 mismatch vs reference"

    # bf16 output dtype (reduced write traffic for bf16 consumers).
    out_b16o = jax.block_until_ready(
        bert_prediction_head_transform(x, w, b, gamma, beta,
                                       out_dtype=jnp.bfloat16))
    assert out_b16o.dtype == jnp.bfloat16
    assert jnp.allclose(out_b16o.astype(jnp.float32), ref, atol=5e-2, rtol=0.0)

    # Ragged row count (M=14), single full-extent block.
    x_r = jax.random.normal(key, (B, 7, H), dtype=jnp.float32)
    ref_r = _reference(x_r, w, b, gamma, beta)
    out_r = jax.block_until_ready(
        bert_prediction_head_transform(x_r, w, b, gamma, beta,
                                       compute_dtype=jnp.float32))
    assert jnp.allclose(out_r, ref_r, atol=2e-4, rtol=2e-4), "ragged-row mismatch"

    # Ragged row count with a small tile (M=14, tm=8) -> exercises the masked
    # partial last block instead of wrapper-side padding/slicing.
    out_p = jax.block_until_ready(
        bert_prediction_head_transform(x_r, w, b, gamma, beta, tm=8,
                                       compute_dtype=jnp.float32))
    assert jnp.allclose(out_p, ref_r, atol=2e-4, rtol=2e-4), "partial-block mismatch"

    print("KERNEL_OK")
</pallas_src>

<mosaic_0001>
module attributes {stable_mosaic.version = 11 : i64} {
  func.func @_transform_kernel(%arg0: i32, %arg1: memref<16x32xf32, #tpu.memory_space<vmem>>, %arg2: memref<32x32xf32, #tpu.memory_space<vmem>>, %arg3: memref<1x32xf32, #tpu.memory_space<vmem>>, %arg4: memref<1x32xf32, #tpu.memory_space<vmem>>, %arg5: memref<1x32xf32, #tpu.memory_space<vmem>>, %arg6: memref<16x32xf32, #tpu.memory_space<vmem>>) attributes {dimension_semantics = [#tpu.dimension_semantics<parallel>], iteration_bounds = array<i64: 1>, scalar_prefetch = 0 : i64, scratch_operands = 0 : i64, tpu.core_type = #tpu.core_type<tc>, window_params = [{transform_indices = @transform_0, window_bounds = array<i64: 16, 32>}, {pipeline_mode = #tpu.pipeline_mode<synchronous>, transform_indices = @transform_1, window_bounds = array<i64: 32, 32>}, {pipeline_mode = #tpu.pipeline_mode<synchronous>, transform_indices = @transform_2, window_bounds = array<i64: 1, 32>}, {pipeline_mode = #tpu.pipeline_mode<synchronous>, transform_indices = @transform_3, window_bounds = array<i64: 1, 32>}, {pipeline_mode = #tpu.pipeline_mode<synchronous>, transform_indices = @transform_4, window_bounds = array<i64: 1, 32>}, {transform_indices = @transform_5, window_bounds = array<i64: 16, 32>}]} {
    %c0 = arith.constant 0 : index
    %c0_0 = arith.constant 0 : index
    %0 = vector.load %arg1[%c0, %c0_0] : memref<16x32xf32, #tpu.memory_space<vmem>>, vector<16x32xf32>
    %c0_1 = arith.constant 0 : index
    %c0_2 = arith.constant 0 : index
    %1 = vector.load %arg2[%c0_1, %c0_2] : memref<32x32xf32, #tpu.memory_space<vmem>>, vector<32x32xf32>
    %cst = arith.constant dense<0.000000e+00> : vector<16x32xf32>
    %2 = tpu.matmul %0, %1, %cst {dimension_numbers = #tpu.dot_dimension_numbers<[1], [0], [0], [1], [0, 0, 1, 1], [], []>} : vector<16x32xf32>, vector<32x32xf32>, vector<16x32xf32> -> vector<16x32xf32>
    %c0_3 = arith.constant 0 : index
    %c0_4 = arith.constant 0 : index
    %3 = vector.load %arg3[%c0_3, %c0_4] : memref<1x32xf32, #tpu.memory_space<vmem>>, vector<1x32xf32>
    %4 = vector.broadcast %3 : vector<1x32xf32> to vector<16x32xf32>
    %5 = arith.addf %2, %4 : vector<16x32xf32>
    %cst_5 = arith.constant 5.000000e-01 : f32
    %6 = vector.broadcast %cst_5 : f32 to vector<16x32xf32>
    %7 = arith.mulf %5, %6 : vector<16x32xf32>
    %cst_6 = arith.constant 0.707106769 : f32
    %8 = vector.broadcast %cst_6 : f32 to vector<16x32xf32>
    %9 = arith.mulf %5, %8 : vector<16x32xf32>
    %10 = math.erf %9 : vector<16x32xf32>
    %cst_7 = arith.constant 1.000000e+00 : f32
    %11 = vector.broadcast %cst_7 : f32 to vector<16x32xf32>
    %12 = arith.addf %11, %10 : vector<16x32xf32>
    %13 = arith.mulf %7, %12 : vector<16x32xf32>
    %cst_8 = arith.constant dense<0.000000e+00> : vector<16xf32>
    %14 = vector.multi_reduction <add>, %13, %cst_8 [1] : vector<16x32xf32> to vector<16xf32>
    %15 = vector.shape_cast %14 : vector<16xf32> to vector<16x1xf32>
    %cst_9 = arith.constant 3.200000e+01 : f32
    %16 = vector.broadcast %cst_9 : f32 to vector<16x1xf32>
    %17 = arith.divf %15, %16 : vector<16x1xf32>
    %18 = arith.mulf %13, %13 : vector<16x32xf32>
    %cst_10 = arith.constant dense<0.000000e+00> : vector<16xf32>
    %19 = vector.multi_reduction <add>, %18, %cst_10 [1] : vector<16x32xf32> to vector<16xf32>
    %20 = vector.shape_cast %19 : vector<16xf32> to vector<16x1xf32>
    %cst_11 = arith.constant 3.200000e+01 : f32
    %21 = vector.broadcast %cst_11 : f32 to vector<16x1xf32>
    %22 = arith.divf %20, %21 : vector<16x1xf32>
    %23 = arith.mulf %17, %17 : vector<16x1xf32>
    %24 = arith.subf %22, %23 : vector<16x1xf32>
    %cst_12 = arith.constant 0.000000e+00 : f32
    %25 = vector.broadcast %cst_12 : f32 to vector<16x1xf32>
    %26 = arith.maximumf %24, %25 : vector<16x1xf32>
    %cst_13 = arith.constant 9.99999996E-13 : f32
    %27 = vector.broadcast %cst_13 : f32 to vector<16x1xf32>
    %28 = arith.addf %26, %27 : vector<16x1xf32>
    %29 = math.rsqrt %28 : vector<16x1xf32>
    %30 = vector.broadcast %17 : vector<16x1xf32> to vector<16x32xf32>
    %31 = arith.subf %13, %30 : vector<16x32xf32>
    %c0_14 = arith.constant 0 : index
    %c0_15 = arith.constant 0 : index
    %32 = vector.load %arg4[%c0_14, %c0_15] : memref<1x32xf32, #tpu.memory_space<vmem>>, vector<1x32xf32>
    %33 = vector.broadcast %32 : vector<1x32xf32> to vector<16x32xf32>
    %34 = vector.broadcast %29 : vector<16x1xf32> to vector<16x32xf32>
    %35 = arith.mulf %33, %34 : vector<16x32xf32>
    %36 = arith.mulf %31, %35 : vector<16x32xf32>
    %c0_16 = arith.constant 0 : index
    %c0_17 = arith.constant 0 : index
    %37 = vector.load %arg5[%c0_16, %c0_17] : memref<1x32xf32, #tpu.memory_space<vmem>>, vector<1x32xf32>
    %38 = vector.broadcast %37 : vector<1x32xf32> to vector<16x32xf32>
    %39 = arith.addf %36, %38 : vector<16x32xf32>
    %c0_18 = arith.constant 0 : index
    %c0_19 = arith.constant 0 : index
    %40 = vector.load %arg6[%c0_18, %c0_19] : memref<16x32xf32, #tpu.memory_space<vmem>>, vector<16x32xf32>
    tpu.vector_store %arg6[%c0_18, %c0_19], %39 {strides = array<i32>} : memref<16x32xf32, #tpu.memory_space<vmem>>, vector<16x32xf32>,
    return
  }
  func.func @transform_0(%arg0: i32) -> (i32, i32) {
    %c0_i32 = arith.constant 0 : i32
    %c0_i32_0 = arith.constant 0 : i32
    return %arg0, %c0_i32 : i32, i32
  }
  func.func @transform_1(%arg0: i32) -> (i32, i32) {
    %c0_i32 = arith.constant 0 : i32
    %c0_i32_0 = arith.constant 0 : i32
    %c0_i32_1 = arith.constant 0 : i32
    return %c0_i32, %c0_i32_0 : i32, i32
  }
  func.func @transform_2(%arg0: i32) -> (i32, i32) {
    %c0_i32 = arith.constant 0 : i32
    %c0_i32_0 = arith.constant 0 : i32
    %c0_i32_1 = arith.constant 0 : i32
    return %c0_i32, %c0_i32_0 : i32, i32
  }
  func.func @transform_3(%arg0: i32) -> (i32, i32) {
    %c0_i32 = arith.constant 0 : i32
    %c0_i32_0 = arith.constant 0 : i32
    %c0_i32_1 = arith.constant 0 : i32
    return %c0_i32, %c0_i32_0 : i32, i32
  }
  func.func @transform_4(%arg0: i32) -> (i32, i32) {
    %c0_i32 = arith.constant 0 : i32
    %c0_i32_0 = arith.constant 0 : i32
    %c0_i32_1 = arith.constant 0 : i32
    return %c0_i32, %c0_i32_0 : i32, i32
  }
  func.func @transform_5(%arg0: i32) -> (i32, i32) {
    %c0_i32 = arith.constant 0 : i32
    %c0_i32_0 = arith.constant 0 : i32
    return %arg0, %c0_i32 : i32, i32
  }
}

</mosaic_0001>

<llo_original>
// kernel: tpu_custom_call.1
$region0: #{tpu_custom_call.1}
  #allocation0 [shape = 'u32[]', space=smem, size = 0x4, offset = 0x4, fixed_abs, tag = 'smem constant byte address 0x4 - core index']
  #allocation1 [shape = 'u32[144,128]{1,0:T(1,128)}', space=vmem, size = 0x12000, scoped, tag = 'internal scratch']
  %s0 = inlined_call_operand.hbm [shape: f32[16,32], index: 0, kind: input, shape index: {}]
  %s1 = inlined_call_operand.hbm [shape: f32[32,32], index: 1, kind: input, shape index: {}]
  %s2 = inlined_call_operand.vmem [shape: f32[1,32], index: 2, kind: input, shape index: {}]
  %s3 = inlined_call_operand.vmem [shape: f32[1,32], index: 3, kind: input, shape index: {}]
  %s4 = inlined_call_operand.vmem [shape: f32[1,32], index: 4, kind: input, shape index: {}]
  %s5 = inlined_call_operand.hbm [shape: f32[16,32], index: 5, kind: output, shape index: {}]
  %s6 = sld [smem:[#allocation0]]
  $region38: #{tpu_custom_call.1} parent=0
    _
  %s8 = ssub.s32 1, %s6
  %s9 = scalar_select 0, %s8, %s6
  $region1: #{tpu_custom_call.1} parent=0
    #allocation2 [shape = 'u8[8192]{0}', space=vmem, size = 0x2000, scoped, tag = 'input window, operand 0, single buffered']
    #allocation3 [shape = 's32[1]{0}', space=sflag, size = 0x4, scoped, tag = 'scoped memory for tpu_custom_call.1']
    #allocation4 [shape = 's32[1]{0}', space=sflag, size = 0x4, scoped, tag = 'scoped memory for tpu_custom_call.1']
    #allocation5 [shape = 'u8[16384]{0}', space=vmem, size = 0x4000, scoped, tag = 'input window, operand 1, single buffered']
    #allocation6 [shape = 's32[1]{0}', space=sflag, size = 0x4, scoped, tag = 'scoped memory for tpu_custom_call.1']
    #allocation7 [shape = 'u8[8192]{0}', space=vmem, size = 0x2000, scoped, tag = 'output window, operand 0, single buffered']
    %10 = vsyncpa [#allocation3], 0
    %11 = vsyncpa [#allocation6], 0
    %12 = vsyncpa [#allocation4], 0
    // Predicated region
    $region2: #{tpu_custom_call.1} parent=1 // pred_check
      _
    $region3: #{tpu_custom_call.1} parent=1 // pred_check_branch
      %14 = sbr.rel (0) target = $region5
    $region4: #{tpu_custom_call.1} parent=1 // pred_region
      %s16 = ssub.s32 256, 256
      %17 = vsyncadd [#allocation3], %s16
      %s18 = sshll.u32 [#allocation2], 4
      %s19 = int_to_ptr.vmem [resolvable:$true] %s18
      %24 = dma.hbm_to_vmem [thread:$0]  %s0, 256, %s19, [#allocation3], 128, 128, 8
    $region5: #{tpu_custom_call.1} parent=1 // pred_fallthru
      _
    // Predicated region
    $region6: #{tpu_custom_call.1} parent=1 // pred_check
      _
    $region7: #{tpu_custom_call.1} parent=1 // pred_check_branch
      %26 = sbr.rel (0) target = $region9
    $region8: #{tpu_custom_call.1} parent=1 // pred_region
      %s28 = ssub.s32 512, 512
      %29 = vsyncadd [#allocation6], %s28
      %s30 = sshll.u32 [#allocation5], 4
      %s31 = int_to_ptr.vmem [resolvable:$true] %s30
      %36 = dma.hbm_to_vmem [thread:$0]  %s1, 512, %s31, [#allocation6], 128, 128, 8
    $region9: #{tpu_custom_call.1} parent=1 // pred_fallthru
      _
    // Predicated region
    $region10: #{tpu_custom_call.1} parent=1 // pred_check
      _
    $region11: #{tpu_custom_call.1} parent=1 // pred_check_branch
      %38 = sbr.rel (0) target = $region13
    $region12: #{tpu_custom_call.1} parent=1 // pred_region
      _
    $region13: #{tpu_custom_call.1} parent=1 // pred_fallthru
      _
    // Predicated region
    $region14: #{tpu_custom_call.1} parent=1 // pred_check
      _
    $region15: #{tpu_custom_call.1} parent=1 // pred_check_branch
      %40 = sbr.rel (0) target = $region17
    $region16: #{tpu_custom_call.1} parent=1 // pred_region
      _
    $region17: #{tpu_custom_call.1} parent=1 // pred_fallthru
      _
    // Predicated region
    $region18: #{tpu_custom_call.1} parent=1 // pred_check
      _
    $region19: #{tpu_custom_call.1} parent=1 // pred_check_branch
      %42 = sbr.rel (0) target = $region21
    $region20: #{tpu_custom_call.1} parent=1 // pred_region
      _
    $region21: #{tpu_custom_call.1} parent=1 // pred_fallthru
      _
    // Predicated region
    $region22: #{tpu_custom_call.1} parent=1 // pred_check
      _
    $region23: #{tpu_custom_call.1} parent=1 // pred_check_branch
      %44 = sbr.rel (0) target = $region25
    $region24: #{tpu_custom_call.1} parent=1 // pred_region
      %45 = dma.done [#allocation3], 256
    $region25: #{tpu_custom_call.1} parent=1 // pred_fallthru
      _
    // Predicated region
    $region26: #{tpu_custom_call.1} parent=1 // pred_check
      _
    $region27: #{tpu_custom_call.1} parent=1 // pred_check_branch
      %47 = sbr.rel (0) target = $region29
    $region28: #{tpu_custom_call.1} parent=1 // pred_region
      %48 = dma.done [#allocation6], 512
    $region29: #{tpu_custom_call.1} parent=1 // pred_fallthru
      _
    %v49 = vld [vmem:[#allocation2] sm:$0xff]
    %v50 = vld [vmem:[#allocation2 + $0x8] sm:$0xff]
    %v51 = vld [vmem:[#allocation5] sm:$0xff]
    %v52 = vld [vmem:[#allocation5 + $0x8] sm:$0xff]
    %v53 = vld [vmem:[#allocation5 + $0x10] sm:$0xff]
    %v54 = vld [vmem:[#allocation5 + $0x18] sm:$0xff]
    %v55 = vld [vmem:[%s2] sm:$0x1]
    %v57 = vlaneseq
    %v58 = vshrl.u32 %v57, 7
    %v59 = vsub.s32 0, %v58
    %v60 = vrot.slane %v55, %v59
    %vm62 = vcmask 261120
    %v64 = vsel %vm62, %v49, 0
    %v67 = vsel %vm62, %v50, 0
    %69 = vmatprep.subr.mxu0 0.0
    %70 = vmatpush1.msra.mxu0 %v51
    %71 = vmatprep.subr.mxu0 0.0
    %72 = vmatpush1.msra.mxu0 %v52
    %73 = vmatprep.subr.mxu0 0.0
    %74 = vmatpush1.msra.mxu0 %v53
    %75 = vmatprep.subr.mxu0 0.0
    %76 = vmatpush1.msra.mxu0 %v54
    %77 = vmatprep.subr.mxu0 0.0
    %78 = vmatpush1.msra.mxu0 0.0
    %79 = vmatprep.subr.mxu0 0.0
    %80 = vmatpush1.msra.mxu0 0.0
    %81 = vmatprep.subr.mxu0 0.0
    %82 = vmatpush1.msra.mxu0 0.0
    %83 = vmatprep.subr.mxu0 0.0
    %84 = vmatpush1.msra.mxu0 0.0
    %85 = vmatprep.subr.mxu0 0.0
    %86 = vmatpush1.msra.mxu0 0.0
    %87 = vmatprep.subr.mxu0 0.0
    %88 = vmatpush1.msra.mxu0 0.0
    %89 = vmatprep.subr.mxu0 0.0
    %90 = vmatpush1.msra.mxu0 0.0
    %91 = vmatprep.subr.mxu0 0.0
    %92 = vmatpush1.msra.mxu0 0.0
    %93 = vmatprep.subr.mxu0 0.0
    %94 = vmatpush1.msra.mxu0 0.0
    %95 = vmatprep.subr.mxu0 0.0
    %96 = vmatpush1.msra.mxu0 0.0
    %97 = vmatprep.subr.mxu0 0.0
    %98 = vmatpush1.msra.mxu0 0.0
    %99 = vmatprep.subr.mxu0 0.0
    %100 = vmatpush1.msra.mxu0 0.0
    %101 = vmatprep.subr.mxu0 0.0
    %102 = vmatpush1.msra.mxu0 0.0
    %103 = vmatprep.subr.mxu0 0.0
    %104 = vmatpush1.msra.mxu0 0.0
    %105 = vmatprep.subr.mxu0 0.0
    %106 = vmatpush1.msra.mxu0 0.0
    %107 = vmatprep.subr.mxu0 0.0
    %108 = vmatpush1.msra.mxu0 0.0
    %109 = vmatprep.subr.mxu0 0.0
    %110 = vmatpush1.msra.mxu0 0.0
    %111 = vmatprep.subr.mxu0 0.0
    %112 = vmatpush1.msra.mxu0 0.0
    %113 = vmatprep.subr.mxu0 0.0
    %114 = vmatpush1.msra.mxu0 0.0
    %115 = vmatprep.subr.mxu0 0.0
    %116 = vmatpush1.msra.mxu0 0.0
    %117 = vmatprep.subr.mxu0 0.0
    %118 = vmatpush1.msra.mxu0 0.0
    %119 = vmatprep.subr.mxu0 0.0
    %120 = vmatpush1.msra.mxu0 0.0
    %121 = vmatprep.subr.mxu0 0.0
    %122 = vmatpush1.msra.mxu0 0.0
    %123 = vmatprep.subr.mxu0 0.0
    %124 = vmatpush1.msra.mxu0 0.0
    %125 = vmatprep.subr.mxu0 0.0
    %126 = vmatpush1.msra.mxu0 0.0
    %127 = vmatprep.subr.mxu0 0.0
    %128 = vmatpush1.msra.mxu0 0.0
    %129 = vmatprep.subr.mxu0 0.0
    %130 = vmatpush1.msra.mxu0 0.0
    %131 = vmatprep.subr.mxu0 0.0
    %132 = vmatpush1.msra.mxu0 0.0
    %133 = vmatprep.mubr.f32.mxu0 0.0
    %134 = vmatmul.mubr.f32.gmra.mrb[0].mxu0 %v64
    %v135 = vpop.f32.mrb[0].mxu0
    %v136 = vadd.f32 %v60, %v135
    %v137 = vpop.f32.mrb[0].mxu0
    %138 = vmatprep.mubr.f32.mxu0 0.0
    %139 = vmatmul.mubr.f32.gmra.mrb[0].mxu0 %v67
    %v140 = vpop.f32.mrb[0].mxu0
    %v141 = vadd.f32 %v60, %v140
    %v142 = vpop.f32.mrb[0].mxu0
    %143 = vdwg.mxu0
    %v144 = vmul.f32 %v136, 0.5
    %v145 = vmul.f32 %v141, 0.5
    %v146 = vmul.f32 %v136, 0.70710677
    %v147 = vmul.f32 %v141, 0.70710677
    %v148 = verf.f32.pop %v146
    %v149 = verf.f32.pop %v147
    %v150 = vadd.f32 %v148, 1.0
    %v151 = vadd.f32 %v149, 1.0
    %v152 = vmul.f32 %v144, %v150
    %v153 = vmul.f32 %v145, %v151
    %v154 = vsel %vm62, %v152, 0.0
    %155 = vadd.xlane.f32.xlu0 %v154
    %v156 = vpop.xlane.xlu0 %155
    %v157 = vsel %vm62, %v153, 0.0
    %158 = vadd.xlane.f32.xlu0 %v157
    %v159 = vpop.xlane.xlu0 %158
    %v160 = vrcp.pop 32.0
    %v161 = vmul.f32 %v156, %v160
    %v162 = vmul.f32 %v159, %v160
    %v163 = vmul.f32 %v152, %v152
    %v164 = vmul.f32 %v153, %v153
    %v165 = vsel %vm62, %v163, 0.0
    %166 = vadd.xlane.f32.xlu0 %v165
    %v167 = vpop.xlane.xlu0 %166
    %v168 = vsel %vm62, %v164, 0.0
    %169 = vadd.xlane.f32.xlu0 %v168
    %v170 = vpop.xlane.xlu0 %169
    %v171 = vmul.f32 %v167, %v160
    %v172 = vmul.f32 %v170, %v160
    %v173 = vmul.f32 %v161, %v161
    %v174 = vmul.f32 %v162, %v162
    %v175 = vsub.f32 %v171, %v173
    %v176 = vsub.f32 %v172, %v174
    %v177 = vmax.f32 %v175, 0.0
    %v178 = vmax.f32 %v176, 0.0
    %v179 = vadd.f32 %v177, 1e-12
    %v180 = vadd.f32 %v178, 1e-12
    %v181 = vrsqrt.pop %v179
    %v182 = vrsqrt.pop %v180
    %v183 = vsub.f32 %v152, %v161
    %v184 = vsub.f32 %v153, %v162
    %v185 = vld [vmem:[%s3] sm:$0x1]
    %v187 = vlaneseq
    %v188 = vshrl.u32 %v187, 7
    %v189 = vsub.s32 0, %v188
    %v190 = vrot.slane %v185, %v189
    %v192 = vmul.f32 %v190, %v181
    %v193 = vmul.f32 %v190, %v182
    %v194 = vmul.f32 %v183, %v192
    %v195 = vmul.f32 %v184, %v193
    %v196 = vld [vmem:[%s4] sm:$0x1]
    %v198 = vlaneseq
    %v199 = vshrl.u32 %v198, 7
    %v200 = vsub.s32 0, %v199
    %v201 = vrot.slane %v196, %v200
    %v203 = vadd.f32 %v194, %v201
    %v204 = vadd.f32 %v195, %v201
    %205 = vst.msk [vmem:[#allocation7] sm:$0xff] %vm62, %v203
    %206 = vst.msk [vmem:[#allocation7 + $0x8] sm:$0xff] %vm62, %v204
    // Predicated region
    $region30: #{tpu_custom_call.1} parent=1 // pred_check
      _
    $region31: #{tpu_custom_call.1} parent=1 // pred_check_branch
      %208 = sbr.rel (0) target = $region33
    $region32: #{tpu_custom_call.1} parent=1 // pred_region
      %s210 = ssub.s32 256, 256
      %211 = vsyncadd [#allocation4], %s210
      %s212 = sshll.u32 [#allocation7], 4
      %s213 = int_to_ptr.vmem [resolvable:$true] %s212
      %218 = dma.vmem_to_hbm [thread:$0]  %s213, 256, %s5, [#allocation4], 128, 128, 8
    $region33: #{tpu_custom_call.1} parent=1 // pred_fallthru
      _
    // Predicated region
    $region34: #{tpu_custom_call.1} parent=1 // pred_check
      _
    $region35: #{tpu_custom_call.1} parent=1 // pred_check_branch
      %220 = sbr.rel (0) target = $region37
    $region36: #{tpu_custom_call.1} parent=1 // pred_region
      %221 = dma.done [#allocation4], 256
    $region37: #{tpu_custom_call.1} parent=1 // pred_fallthru
      _
    %222 = vsyncpa [#allocation3], 1
    %223 = vsyncpa [#allocation6], 1
    %224 = vsyncpa [#allocation4], 1

</llo_original>
